<compile_context>
chip_gen: v6e
topology: v6e:2x2x1
jax: 0.10.0
libtpu: 0.0.40
codegen_flags: <defaults>
</compile_context>

<pallas_src>
import functools

import jax
import jax.numpy as jnp
from jax.experimental import pallas as pl
from jax.experimental.pallas import tpu as pltpu


def _round_up(n, m):
    return ((n + m - 1) // m) * m


# ----------------------------------------------------------------------------
# Kernel
# ----------------------------------------------------------------------------
def _fused_mlp_kernel(*refs, num_layers, activation, discrim, matmul_dtype):
    """refs = (x, w1, b1, ..., wN, bN, out).  Whole MLP chain on one batch tile.

    Hidden activations never leave VMEM/vregs.  Matmuls feed the MXU with
    `matmul_dtype` (bf16) operands and accumulate in f32; bias add and the
    nonlinearities run in f32 on the VPU/EUP.
    """
    x_ref = refs[0]
    o_ref = refs[1 + 2 * num_layers]

    h = x_ref[...].astype(jnp.float32)
    for i in range(num_layers):
        w_ref = refs[1 + 2 * i]
        b_ref = refs[2 + 2 * i]
        h = jnp.dot(h.astype(matmul_dtype), w_ref[...],
                    preferred_element_type=jnp.float32)
        h = h + b_ref[...].astype(jnp.float32)   # (1, dout) broadcast over rows
        if i != num_layers - 1:
            if activation == "relu":
                h = jnp.maximum(h, 0.0)
            else:                                # fused 'sigmoid' activation
                h = jax.nn.sigmoid(h)
        elif discrim:                            # fused final discriminator sigmoid
            h = jax.nn.sigmoid(h)
    # Lane-dense store of the whole padded block; wrapper slices off padding.
    o_ref[...] = h.astype(o_ref.dtype)


# ----------------------------------------------------------------------------
# Wrapper
# ----------------------------------------------------------------------------
def _choose_tile_m(batch, block_m):
    """Rows per grid step.  Prefer an even (>=2) number of batch tiles so both
    v7x TensorCores get work; keep the tile a multiple of 8 sublanes."""
    if batch <= 8:
        return batch
    return min(block_m, _round_up(pl.cdiv(batch, 2), 8))


def _vmem_budget_bytes(padded_params, tm, din_p, out_dim_p):
    """Conservative VMEM need: pipeline double-buffers every BlockSpec input
    (even constant-index whole weights) plus the I/O tiles, plus headroom for
    the in-kernel f32 intermediates."""
    w_bytes = sum(w.size * w.dtype.itemsize + b.size * b.dtype.itemsize
                  for (w, b) in padded_params)
    io_bytes = tm * (din_p + out_dim_p) * 4
    widest = max(w.shape[1] for (w, _) in padded_params)
    return 2 * (w_bytes + io_bytes) + 4 * tm * widest * 4


def mlp_forward(padded_params, x, *, out_dim, activation="relu", discrim=False,
                dropout=-1, block_m=512):
    """Fused Pallas forward pass mirroring MLP.forward.

    padded_params: output of `pad_mlp_params` — list of (w, b) with
    w:(din_p, dout_p) bf16 (feature dims padded to 128) and b:(1, dout_p) f32.
    x:(B, input_dim) f32.  Returns (B, out_dim).
    """
    del dropout  # TODO(synk): train-time dropout omitted; default dropout=-1 never applies it.
    assert activation in ("relu", "sigmoid")
    B = x.shape[0]
    num_layers = len(padded_params)
    din_p = padded_params[0][0].shape[0]
    out_dim_p = padded_params[-1][0].shape[1]
    matmul_dtype = padded_params[0][0].dtype

    # Pad x's feature dim so the first-layer LHS load / MXU K pass is lane-dense.
    if x.shape[1] != din_p:
        x = jnp.pad(x, ((0, 0), (0, din_p - x.shape[1])))

    tm = _choose_tile_m(B, block_m)
    grid = (pl.cdiv(B, tm),)

    in_specs = [pl.BlockSpec((tm, din_p), lambda i: (i, 0))]
    flat_args = [x]
    for (w_p, b_p) in padded_params:
        in_specs.append(pl.BlockSpec(w_p.shape, lambda i: (0, 0)))
        in_specs.append(pl.BlockSpec(b_p.shape, lambda i: (0, 0)))
        flat_args.extend((w_p, b_p))

    # Advisory cost for XLA's scheduler around the custom call.
    flops = 2 * B * sum(w.shape[0] * w.shape[1] for (w, _) in padded_params)
    transcendentals = 0
    if activation == "sigmoid":
        transcendentals += B * sum(w.shape[1] for (w, _) in padded_params[:-1])
    if discrim:
        transcendentals += B * out_dim_p
    bytes_accessed = (x.size * x.dtype.itemsize
                      + sum(w.size * w.dtype.itemsize + b.size * b.dtype.itemsize
                            for (w, b) in padded_params)
                      + B * out_dim_p * x.dtype.itemsize)
    cost = pl.CostEstimate(flops=flops, transcendentals=transcendentals,
                           bytes_accessed=bytes_accessed)

    # Explicit scoped-VMEM budget (v5e default is only 16 MiB); cap well below
    # v7x's 64 MiB physical VMEM.
    vmem_limit = int(min(max(_vmem_budget_bytes(padded_params, tm, din_p, out_dim_p),
                             32 << 20), 64 << 20))

    kernel = functools.partial(
        _fused_mlp_kernel,
        num_layers=num_layers,
        activation=activation,
        discrim=discrim,
        matmul_dtype=matmul_dtype,
    )

    out_padded = pl.pallas_call(
        kernel,
        out_shape=jax.ShapeDtypeStruct((B, out_dim_p), x.dtype),
        grid=grid,
        in_specs=in_specs,
        out_specs=pl.BlockSpec((tm, out_dim_p), lambda i: (i, 0)),
        compiler_params=pltpu.CompilerParams(
            dimension_semantics=("parallel",),
            vmem_limit_bytes=vmem_limit,
        ),
        cost_estimate=cost,
    )(*flat_args)

    # Strip lane padding with plain JAX (essentially free vs. masked stores).
    return out_padded[:, :out_dim]


# ----------------------------------------------------------------------------
# Parameters
# ----------------------------------------------------------------------------
def init_mlp_params(key, input_dim, output_dim, hidden_size):
    """Uniform(+-1/sqrt(fan_in)) init mimicking nn.Linear defaults.

    Weights stored as (in, out) == PyTorch (out, in) transposed; bias (1, out).
    Returned in f32; `pad_mlp_params` converts weights to bf16 + pads.
    """
    dims = [input_dim] + list(hidden_size) + [output_dim]
    params = []
    for i in range(len(dims) - 1):
        key, kw, kb = jax.random.split(key, 3)
        bound = 1.0 / jnp.sqrt(dims[i])
        w = jax.random.uniform(kw, (dims[i], dims[i + 1]),
                               minval=-bound, maxval=bound, dtype=jnp.float32)
        b = jax.random.uniform(kb, (1, dims[i + 1]),
                               minval=-bound, maxval=bound, dtype=jnp.float32)
        params.append((w, b))
    return params


def pad_mlp_params(params, weight_dtype=jnp.bfloat16):
    """One-time (load-time) prep: zero-pad every feature dim to a multiple of
    128 (lane-dense VMEM layout) and cast weights to `weight_dtype`.

    Zero padding is exact: padded hidden units get bias 0 and feed all-zero
    rows of the next padded weight, so they contribute nothing; padding of the
    final layer is sliced off in the wrapper.
    """
    prev = _round_up(params[0][0].shape[0], 128)
    padded = []
    for (w, b) in params:
        din_i, dout_i = w.shape
        assert din_i <= prev
        dout_p = _round_up(dout_i, 128)
        w_p = jnp.zeros((prev, dout_p), weight_dtype).at[:din_i, :dout_i].set(
            w.astype(weight_dtype))
        b_p = jnp.zeros((1, dout_p), jnp.float32).at[:, :dout_i].set(
            b.astype(jnp.float32))
        padded.append((w_p, b_p))
        prev = dout_p
    return padded


# ----------------------------------------------------------------------------
# Reference (same bf16-in / f32-accumulate matmul semantics as the kernel)
# ----------------------------------------------------------------------------
def mlp_reference(params, x, *, activation="relu", discrim=False,
                  matmul_dtype=jnp.bfloat16):
    n = len(params)
    h = x.astype(jnp.float32)
    for i, (w, b) in enumerate(params):
        h = jnp.dot(h.astype(matmul_dtype), w.astype(matmul_dtype),
                    preferred_element_type=jnp.float32) + b.astype(jnp.float32)
        if i != n - 1:
            h = jnp.maximum(h, 0.0) if activation == "relu" else jax.nn.sigmoid(h)
        elif discrim:
            h = jax.nn.sigmoid(h)
    return h


if __name__ == "__main__":
    key = jax.random.PRNGKey(0)

    # --- Config A: relu MLP, lane-aligned hidden dims, multi-tile batch -----
    batch, input_dim, output_dim = 256, 16, 8
    hidden_size = (256, 128)
    k_params, k_x, key = jax.random.split(key, 3)
    params_a = init_mlp_params(k_params, input_dim, output_dim, hidden_size)
    padded_a = pad_mlp_params(params_a)
    x_a = jax.random.normal(k_x, (batch, input_dim), dtype=jnp.float32)

    fwd_a = jax.jit(functools.partial(mlp_forward, out_dim=output_dim,
                                      activation="relu", discrim=False))
    out_a = jax.block_until_ready(fwd_a(padded_a, x_a))
    ref_a = mlp_reference(params_a, x_a, activation="relu", discrim=False)
    assert out_a.shape == (batch, output_dim)
    assert jnp.allclose(out_a, ref_a, atol=5e-3, rtol=5e-3), "config A mismatch"

    # --- Config B: sigmoid activation + discrim head, non-aligned dims ------
    batch_b, in_b, out_dim_b = 40, 10, 3
    hidden_b = (48, 24)
    k_params_b, k_x_b = jax.random.split(key)
    params_b = init_mlp_params(k_params_b, in_b, out_dim_b, hidden_b)
    padded_b = pad_mlp_params(params_b)
    x_b = jax.random.normal(k_x_b, (batch_b, in_b), dtype=jnp.float32)

    fwd_b = jax.jit(functools.partial(mlp_forward, out_dim=out_dim_b,
                                      activation="sigmoid", discrim=True))
    out_b = jax.block_until_ready(fwd_b(padded_b, x_b))
    ref_b = mlp_reference(params_b, x_b, activation="sigmoid", discrim=True)
    assert out_b.shape == (batch_b, out_dim_b)
    assert jnp.allclose(out_b, ref_b, atol=5e-3, rtol=5e-3), "config B mismatch"

    print("KERNEL_OK")
</pallas_src>

<mosaic_0001>
module attributes {stable_mosaic.version = 11 : i64} {
  func.func @_fused_mlp_kernel(%arg0: i32, %arg1: memref<128x128xf32, #tpu.memory_space<vmem>>, %arg2: memref<128x256xbf16, #tpu.memory_space<vmem>>, %arg3: memref<1x256xf32, #tpu.memory_space<vmem>>, %arg4: memref<256x128xbf16, #tpu.memory_space<vmem>>, %arg5: memref<1x128xf32, #tpu.memory_space<vmem>>, %arg6: memref<128x128xbf16, #tpu.memory_space<vmem>>, %arg7: memref<1x128xf32, #tpu.memory_space<vmem>>, %arg8: memref<128x128xf32, #tpu.memory_space<vmem>>) attributes {dimension_semantics = [#tpu.dimension_semantics<parallel>], iteration_bounds = array<i64: 2>, scalar_prefetch = 0 : i64, scratch_operands = 0 : i64, tpu.core_type = #tpu.core_type<tc>, window_params = [{transform_indices = @transform_0, window_bounds = array<i64: 128, 128>}, {pipeline_mode = #tpu.pipeline_mode<synchronous>, transform_indices = @transform_1, window_bounds = array<i64: 128, 256>}, {pipeline_mode = #tpu.pipeline_mode<synchronous>, transform_indices = @transform_2, window_bounds = array<i64: 1, 256>}, {pipeline_mode = #tpu.pipeline_mode<synchronous>, transform_indices = @transform_3, window_bounds = array<i64: 256, 128>}, {pipeline_mode = #tpu.pipeline_mode<synchronous>, transform_indices = @transform_4, window_bounds = array<i64: 1, 128>}, {pipeline_mode = #tpu.pipeline_mode<synchronous>, transform_indices = @transform_5, window_bounds = array<i64: 128, 128>}, {pipeline_mode = #tpu.pipeline_mode<synchronous>, transform_indices = @transform_6, window_bounds = array<i64: 1, 128>}, {transform_indices = @transform_7, window_bounds = array<i64: 128, 128>}]} {
    %c0 = arith.constant 0 : index
    %c0_0 = arith.constant 0 : index
    %0 = vector.load %arg1[%c0, %c0_0] : memref<128x128xf32, #tpu.memory_space<vmem>>, vector<128x128xf32>
    %1 = arith.truncf %0 : vector<128x128xf32> to vector<128x128xbf16>
    %c0_1 = arith.constant 0 : index
    %c0_2 = arith.constant 0 : index
    %2 = vector.load %arg2[%c0_1, %c0_2] : memref<128x256xbf16, #tpu.memory_space<vmem>>, vector<128x256xbf16>
    %cst = arith.constant dense<0.000000e+00> : vector<128x256xf32>
    %3 = tpu.matmul %1, %2, %cst {dimension_numbers = #tpu.dot_dimension_numbers<[1], [0], [0], [1], [0, 0, 1, 1], [], []>} : vector<128x128xbf16>, vector<128x256xbf16>, vector<128x256xf32> -> vector<128x256xf32>
    %c0_3 = arith.constant 0 : index
    %c0_4 = arith.constant 0 : index
    %4 = vector.load %arg3[%c0_3, %c0_4] : memref<1x256xf32, #tpu.memory_space<vmem>>, vector<1x256xf32>
    %5 = vector.broadcast %4 : vector<1x256xf32> to vector<128x256xf32>
    %6 = arith.addf %3, %5 : vector<128x256xf32>
    %cst_5 = arith.constant 0.000000e+00 : f32
    %7 = vector.broadcast %cst_5 : f32 to vector<128x256xf32>
    %8 = arith.maximumf %6, %7 : vector<128x256xf32>
    %9 = arith.truncf %8 : vector<128x256xf32> to vector<128x256xbf16>
    %c0_6 = arith.constant 0 : index
    %c0_7 = arith.constant 0 : index
    %10 = vector.load %arg4[%c0_6, %c0_7] : memref<256x128xbf16, #tpu.memory_space<vmem>>, vector<256x128xbf16>
    %cst_8 = arith.constant dense<0.000000e+00> : vector<128x128xf32>
    %11 = tpu.matmul %9, %10, %cst_8 {dimension_numbers = #tpu.dot_dimension_numbers<[1], [0], [0], [1], [0, 0, 1, 1], [], []>} : vector<128x256xbf16>, vector<256x128xbf16>, vector<128x128xf32> -> vector<128x128xf32>
    %c0_9 = arith.constant 0 : index
    %c0_10 = arith.constant 0 : index
    %12 = vector.load %arg5[%c0_9, %c0_10] : memref<1x128xf32, #tpu.memory_space<vmem>>, vector<1x128xf32>
    %13 = vector.broadcast %12 : vector<1x128xf32> to vector<128x128xf32>
    %14 = arith.addf %11, %13 : vector<128x128xf32>
    %cst_11 = arith.constant 0.000000e+00 : f32
    %15 = vector.broadcast %cst_11 : f32 to vector<128x128xf32>
    %16 = arith.maximumf %14, %15 : vector<128x128xf32>
    %17 = arith.truncf %16 : vector<128x128xf32> to vector<128x128xbf16>
    %c0_12 = arith.constant 0 : index
    %c0_13 = arith.constant 0 : index
    %18 = vector.load %arg6[%c0_12, %c0_13] : memref<128x128xbf16, #tpu.memory_space<vmem>>, vector<128x128xbf16>
    %cst_14 = arith.constant dense<0.000000e+00> : vector<128x128xf32>
    %19 = tpu.matmul %17, %18, %cst_14 {dimension_numbers = #tpu.dot_dimension_numbers<[1], [0], [0], [1], [0, 0, 1, 1], [], []>} : vector<128x128xbf16>, vector<128x128xbf16>, vector<128x128xf32> -> vector<128x128xf32>
    %c0_15 = arith.constant 0 : index
    %c0_16 = arith.constant 0 : index
    %20 = vector.load %arg7[%c0_15, %c0_16] : memref<1x128xf32, #tpu.memory_space<vmem>>, vector<1x128xf32>
    %21 = vector.broadcast %20 : vector<1x128xf32> to vector<128x128xf32>
    %22 = arith.addf %19, %21 : vector<128x128xf32>
    %c0_17 = arith.constant 0 : index
    %c0_18 = arith.constant 0 : index
    %23 = vector.load %arg8[%c0_17, %c0_18] : memref<128x128xf32, #tpu.memory_space<vmem>>, vector<128x128xf32>
    tpu.vector_store %arg8[%c0_17, %c0_18], %22 {strides = array<i32>} : memref<128x128xf32, #tpu.memory_space<vmem>>, vector<128x128xf32>,
    return
  }
  func.func @transform_0(%arg0: i32) -> (i32, i32) {
    %c0_i32 = arith.constant 0 : i32
    %c0_i32_0 = arith.constant 0 : i32
    return %arg0, %c0_i32 : i32, i32
  }
  func.func @transform_1(%arg0: i32) -> (i32, i32) {
    %c0_i32 = arith.constant 0 : i32
    %c0_i32_0 = arith.constant 0 : i32
    %c0_i32_1 = arith.constant 0 : i32
    return %c0_i32, %c0_i32_0 : i32, i32
  }
  func.func @transform_2(%arg0: i32) -> (i32, i32) {
    %c0_i32 = arith.constant 0 : i32
    %c0_i32_0 = arith.constant 0 : i32
    %c0_i32_1 = arith.constant 0 : i32
    return %c0_i32, %c0_i32_0 : i32, i32
  }
  func.func @transform_3(%arg0: i32) -> (i32, i32) {
    %c0_i32 = arith.constant 0 : i32
    %c0_i32_0 = arith.constant 0 : i32
    %c0_i32_1 = arith.constant 0 : i32
    return %c0_i32, %c0_i32_0 : i32, i32
  }
  func.func @transform_4(%arg0: i32) -> (i32, i32) {
    %c0_i32 = arith.constant 0 : i32
    %c0_i32_0 = arith.constant 0 : i32
    %c0_i32_1 = arith.constant 0 : i32
    return %c0_i32, %c0_i32_0 : i32, i32
  }
  func.func @transform_5(%arg0: i32) -> (i32, i32) {
    %c0_i32 = arith.constant 0 : i32
    %c0_i32_0 = arith.constant 0 : i32
    %c0_i32_1 = arith.constant 0 : i32
    return %c0_i32, %c0_i32_0 : i32, i32
  }
  func.func @transform_6(%arg0: i32) -> (i32, i32) {
    %c0_i32 = arith.constant 0 : i32
    %c0_i32_0 = arith.constant 0 : i32
    %c0_i32_1 = arith.constant 0 : i32
    return %c0_i32, %c0_i32_0 : i32, i32
  }
  func.func @transform_7(%arg0: i32) -> (i32, i32) {
    %c0_i32 = arith.constant 0 : i32
    %c0_i32_0 = arith.constant 0 : i32
    return %arg0, %c0_i32 : i32, i32
  }
}

</mosaic_0001>

<llo_original>
// kernel: mlp_forward.1
$region0: #{mlp_forward.1}
  #allocation0 [shape = 'u32[]', space=smem, size = 0x4, offset = 0x4, fixed_abs, tag = 'smem constant byte address 0x4 - core index']
  #allocation1 [shape = 'u32[144,128]{1,0:T(1,128)}', space=vmem, size = 0x12000, scoped, tag = 'internal scratch']
  %s0 = inlined_call_operand.vmem [shape: f32[256,128], index: 0, kind: input, shape index: {}]
  %s1 = inlined_call_operand.vmem [shape: bf16[128,256], index: 1, kind: input, shape index: {}]
  %s2 = inlined_call_operand.vmem [shape: f32[1,256], index: 2, kind: input, shape index: {}]
  %s3 = inlined_call_operand.vmem [shape: bf16[256,128], index: 3, kind: input, shape index: {}]
  %s4 = inlined_call_operand.vmem [shape: f32[1,128], index: 4, kind: input, shape index: {}]
  %s5 = inlined_call_operand.vmem [shape: bf16[128,128], index: 5, kind: input, shape index: {}]
  %s6 = inlined_call_operand.vmem [shape: f32[1,128], index: 6, kind: input, shape index: {}]
  %s7 = inlined_call_operand.vmem [shape: f32[256,128], index: 7, kind: output, shape index: {}]
  %s8 = sld [smem:[#allocation0]]
  $region61: #{mlp_forward.1} parent=0
    _
  %s10 = ssub.s32 1, %s8
  %s11 = scalar_select 0, %s10, %s8
  loop: start=0, step=1, limit=4
  $region2: #{mlp_forward.1} parent=0 // loop_pre_header
    _
  $region3: #{mlp_forward.1} parent=0 // loop_header
    %s13 = sphi 0, %s17
    %p14 = scmp.ge.s32.totalorder %s13, 4
    %s23 = sphi 0, %s25
    %s26 = sphi 0, %s23
    %s27 = sphi 0, %s26
    %s43 = sphi 0, %s27
    %s47 = sphi 0, %s47
    %s49 = sphi 0, %s47
    %s50 = sphi 0, %s49
    %s64 = sphi 0, %s50
    %s68 = sphi 0, %s68
    %s70 = sphi 0, %s68
    %s71 = sphi 0, %s70
    %s85 = sphi 0, %s71
    %s89 = sphi 0, %s89
    %s91 = sphi 0, %s89
    %s92 = sphi 0, %s91
    %s106 = sphi 0, %s92
    %s110 = sphi 0, %s110
    %s112 = sphi 0, %s110
    %s113 = sphi 0, %s112
    %s127 = sphi 0, %s113
    %s131 = sphi 0, %s131
    %s133 = sphi 0, %s131
    %s134 = sphi 0, %s133
    %s148 = sphi 0, %s134
    %s152 = sphi 0, %s152
    %s154 = sphi 0, %s152
    %s155 = sphi 0, %s154
    %s169 = sphi 0, %s155
    %s175 = sphi 0, %s177
    %s178 = sphi 0, %s175
    %s179 = sphi 0, %s178
    %s195 = sphi 0, %s179
  $region4: #{mlp_forward.1} parent=0 // loop_header_branch
    %16 = sbr.rel (%p14) target = $region8
  $region5: #{mlp_forward.1} parent=0 // loop_body
    %s18 = ssub.s32 %s13, 1
    %s19 = ssub.s32 %s13, 2
    %s20 = sadd.s32 %s13, 1
    %s21 = ssub.s32 %s13, %s20
    %p22 = scmp.eq.s32.totalorder %s21, 0
    %s24 = sadd.s32 %s23, 1
    %s25 = scalar_select %p22, %s23, %s24
    %p28 = pneg %p22
    %p29 = scmp.eq.s32.totalorder %s13, 1
    %p30 = por %p28, %p29
    %p31 = scmp.ne.s32.totalorder %s23, %s26
    %p32 = scmp.eq.s32.totalorder %s13, 0
    %p33 = por %p31, %p32
    %p34 = scmp.ne.s32.totalorder %s23, %s26
    %p35 = scmp.eq.s32.totalorder %s18, 1
    %p36 = por %p34, %p35
    %p37 = scmp.ne.s32.totalorder %s26, %s27
    %p38 = scmp.eq.s32.totalorder %s18, 0
    %p39 = por %p37, %p38
    %p40 = scmp.ne.s32.totalorder %s26, %s27
    %p41 = scmp.eq.s32.totalorder %s19, 1
    %p42 = por %p40, %p41
    %p44 = scmp.ne.s32.totalorder %s27, %s43
    %p45 = scmp.eq.s32.totalorder %s19, 0
    %p46 = por %p44, %p45
    %s48 = sadd.s32 %s47, 1
    %p51 = scmp.eq.s32.totalorder %s13, 1
    %p52 = scmp.ne.s32.totalorder %s47, %s49
    %p53 = scmp.eq.s32.totalorder %s13, 0
    %p54 = por %p52, %p53
    %p55 = scmp.ne.s32.totalorder %s47, %s49
    %p56 = scmp.eq.s32.totalorder %s18, 1
    %p57 = por %p55, %p56
    %p58 = scmp.ne.s32.totalorder %s49, %s50
    %p59 = scmp.eq.s32.totalorder %s18, 0
    %p60 = por %p58, %p59
    %p61 = scmp.ne.s32.totalorder %s49, %s50
    %p62 = scmp.eq.s32.totalorder %s19, 1
    %p63 = por %p61, %p62
    %p65 = scmp.ne.s32.totalorder %s50, %s64
    %p66 = scmp.eq.s32.totalorder %s19, 0
    %p67 = por %p65, %p66
    %s69 = sadd.s32 %s68, 1
    %p72 = scmp.eq.s32.totalorder %s13, 1
    %p73 = scmp.ne.s32.totalorder %s68, %s70
    %p74 = scmp.eq.s32.totalorder %s13, 0
    %p75 = por %p73, %p74
    %p76 = scmp.ne.s32.totalorder %s68, %s70
    %p77 = scmp.eq.s32.totalorder %s18, 1
    %p78 = por %p76, %p77
    %p79 = scmp.ne.s32.totalorder %s70, %s71
    %p80 = scmp.eq.s32.totalorder %s18, 0
    %p81 = por %p79, %p80
    %p82 = scmp.ne.s32.totalorder %s70, %s71
    %p83 = scmp.eq.s32.totalorder %s19, 1
    %p84 = por %p82, %p83
    %p86 = scmp.ne.s32.totalorder %s71, %s85
    %p87 = scmp.eq.s32.totalorder %s19, 0
    %p88 = por %p86, %p87
    %s90 = sadd.s32 %s89, 1
    %p93 = scmp.eq.s32.totalorder %s13, 1
    %p94 = scmp.ne.s32.totalorder %s89, %s91
    %p95 = scmp.eq.s32.totalorder %s13, 0
    %p96 = por %p94, %p95
    %p97 = scmp.ne.s32.totalorder %s89, %s91
    %p98 = scmp.eq.s32.totalorder %s18, 1
    %p99 = por %p97, %p98
    %p100 = scmp.ne.s32.totalorder %s91, %s92
    %p101 = scmp.eq.s32.totalorder %s18, 0
    %p102 = por %p100, %p101
    %p103 = scmp.ne.s32.totalorder %s91, %s92
    %p104 = scmp.eq.s32.totalorder %s19, 1
    %p105 = por %p103, %p104
    %p107 = scmp.ne.s32.totalorder %s92, %s106
    %p108 = scmp.eq.s32.totalorder %s19, 0
    %p109 = por %p107, %p108
    %s111 = sadd.s32 %s110, 1
    %p114 = scmp.eq.s32.totalorder %s13, 1
    %p115 = scmp.ne.s32.totalorder %s110, %s112
    %p116 = scmp.eq.s32.totalorder %s13, 0
    %p117 = por %p115, %p116
    %p118 = scmp.ne.s32.totalorder %s110, %s112
    %p119 = scmp.eq.s32.totalorder %s18, 1
    %p120 = por %p118, %p119
    %p121 = scmp.ne.s32.totalorder %s112, %s113
    %p122 = scmp.eq.s32.totalorder %s18, 0
    %p123 = por %p121, %p122
    %p124 = scmp.ne.s32.totalorder %s112, %s113
    %p125 = scmp.eq.s32.totalorder %s19, 1
    %p126 = por %p124, %p125
    %p128 = scmp.ne.s32.totalorder %s113, %s127
    %p129 = scmp.eq.s32.totalorder %s19, 0
    %p130 = por %p128, %p129
    %s132 = sadd.s32 %s131, 1
    %p135 = scmp.eq.s32.totalorder %s13, 1
    %p136 = scmp.ne.s32.totalorder %s131, %s133
    %p137 = scmp.eq.s32.totalorder %s13, 0
    %p138 = por %p136, %p137
    %p139 = scmp.ne.s32.totalorder %s131, %s133
    %p140 = scmp.eq.s32.totalorder %s18, 1
    %p141 = por %p139, %p140
    %p142 = scmp.ne.s32.totalorder %s133, %s134
    %p143 = scmp.eq.s32.totalorder %s18, 0
    %p144 = por %p142, %p143
    %p145 = scmp.ne.s32.totalorder %s133, %s134
    %p146 = scmp.eq.s32.totalorder %s19, 1
    %p147 = por %p145, %p146
    %p149 = scmp.ne.s32.totalorder %s134, %s148
    %p150 = scmp.eq.s32.totalorder %s19, 0
    %p151 = por %p149, %p150
    %s153 = sadd.s32 %s152, 1
    %p156 = scmp.eq.s32.totalorder %s13, 1
    %p157 = scmp.ne.s32.totalorder %s152, %s154
    %p158 = scmp.eq.s32.totalorder %s13, 0
    %p159 = por %p157, %p158
    %p160 = scmp.ne.s32.totalorder %s152, %s154
    %p161 = scmp.eq.s32.totalorder %s18, 1
    %p162 = por %p160, %p161
    %p163 = scmp.ne.s32.totalorder %s154, %s155
    %p164 = scmp.eq.s32.totalorder %s18, 0
    %p165 = por %p163, %p164
    %p166 = scmp.ne.s32.totalorder %s154, %s155
    %p167 = scmp.eq.s32.totalorder %s19, 1
    %p168 = por %p166, %p167
    %p170 = scmp.ne.s32.totalorder %s155, %s169
    %p171 = scmp.eq.s32.totalorder %s19, 0
    %p172 = por %p170, %p171
    %s173 = ssub.s32 %s13, %s20
    %p174 = scmp.eq.s32.totalorder %s173, 0
    %s176 = sadd.s32 %s175, 1
    %s177 = scalar_select %p174, %s175, %s176
    %p180 = pneg %p174
    %p181 = scmp.eq.s32.totalorder %s13, 1
    %p182 = por %p180, %p181
    %p183 = scmp.ne.s32.totalorder %s175, %s178
    %p184 = scmp.eq.s32.totalorder %s13, 0
    %p185 = por %p183, %p184
    %p186 = scmp.ne.s32.totalorder %s175, %s178
    %p187 = scmp.eq.s32.totalorder %s18, 1
    %p188 = por %p186, %p187
    %p189 = scmp.ne.s32.totalorder %s178, %s179
    %p190 = scmp.eq.s32.totalorder %s18, 0
    %p191 = por %p189, %p190
    %p192 = scmp.ne.s32.totalorder %s178, %s179
    %p193 = scmp.eq.s32.totalorder %s19, 1
    %p194 = por %p192, %p193
    %p196 = scmp.ne.s32.totalorder %s179, %s195
    %p197 = scmp.eq.s32.totalorder %s19, 0
    %p198 = por %p196, %p197
    %p199 = scmp.le.s32.totalorder 1, %s13
    %p200 = scmp.lt.s32.totalorder %s13, 3
    %p201 = pnand %p199, %p200
    %p202 = pneg %p201
    // Predicated region
    $region9: #{mlp_forward.1} parent=5 // pred_check
      _
    $region10: #{mlp_forward.1} parent=5 // pred_check_branch
      %204 = sbr.rel (%p201) target = $region12
    $region11: #{mlp_forward.1} parent=5 // pred_region
      %s205 = ssub.s32 %s13, 1
      // Predicated region
      $region13: #{mlp_forward.1} parent=11 // pred_check
        %p206 = pneg %p60
      $region14: #{mlp_forward.1} parent=11 // pred_check_branch
        %208 = sbr.rel (%p206) target = $region16
      $region15: #{mlp_forward.1} parent=11 // pred_region
        _
      $region16: #{mlp_forward.1} parent=11 // pred_fallthru
        _
      // Predicated region
      $region17: #{mlp_forward.1} parent=11 // pred_check
        %p209 = pneg %p81
      $region18: #{mlp_forward.1} parent=11 // pred_check_branch
        %211 = sbr.rel (%p209) target = $region20
      $region19: #{mlp_forward.1} parent=11 // pred_region
        _
      $region20: #{mlp_forward.1} parent=11 // pred_fallthru
        _
      // Predicated region
      $region21: #{mlp_forward.1} parent=11 // pred_check
        %p212 = pneg %p102
      $region22: #{mlp_forward.1} parent=11 // pred_check_branch
        %214 = sbr.rel (%p212) target = $region24
      $region23: #{mlp_forward.1} parent=11 // pred_region
        _
      $region24: #{mlp_forward.1} parent=11 // pred_fallthru
        _
      // Predicated region
      $region25: #{mlp_forward.1} parent=11 // pred_check
        %p215 = pneg %p123
      $region26: #{mlp_forward.1} parent=11 // pred_check_branch
        %217 = sbr.rel (%p215) target = $region28
      $region27: #{mlp_forward.1} parent=11 // pred_region
        _
      $region28: #{mlp_forward.1} parent=11 // pred_fallthru
        _
      // Predicated region
      $region29: #{mlp_forward.1} parent=11 // pred_check
        %p218 = pneg %p144
      $region30: #{mlp_forward.1} parent=11 // pred_check_branch
        %220 = sbr.rel (%p218) target = $region32
      $region31: #{mlp_forward.1} parent=11 // pred_region
        _
      $region32: #{mlp_forward.1} parent=11 // pred_fallthru
        _
      // Predicated region
      $region33: #{mlp_forward.1} parent=11 // pred_check
        %p221 = pneg %p165
      $region34: #{mlp_forward.1} parent=11 // pred_check_branch
        %223 = sbr.rel (%p221) target = $region36
      $region35: #{mlp_forward.1} parent=11 // pred_region
        _
      $region36: #{mlp_forward.1} parent=11 // pred_fallthru
        _
    $region12: #{mlp_forward.1} parent=5 // pred_fallthru
      _
    %p224 = scmp.lt.s32.totalorder %s13, 2
    // Predicated region
    $region37: #{mlp_forward.1} parent=5 // pred_check
      %p225 = pneg %p224
    $region38: #{mlp_forward.1} parent=5 // pred_check_branch
      %227 = sbr.rel (%p225) target = $region40
    $region39: #{mlp_forward.1} parent=5 // pred_region
      // Predicated region
      $region41: #{mlp_forward.1} parent=39 // pred_check
        %p228 = pneg %p33
      $region42: #{mlp_forward.1} parent=39 // pred_check_branch
        %230 = sbr.rel (%p228) target = $region44
      $region43: #{mlp_forward.1} parent=39 // pred_region
        %s231 = smul.u32 16, %s13
        %p232 = scmp.lt.s32.totalorder %s231, 31
        %s233 = scalar_select %p232, %s231, 31
        %s234 = smul.addr %s233, 8
        %s235 = scalar_lea.vmem %s0, %s234
        %s236 = smul.u32 16, %s13
      $region44: #{mlp_forward.1} parent=39 // pred_fallthru
        _
    $region40: #{mlp_forward.1} parent=5 // pred_fallthru
      _
    %p237 = scmp.le.s32.totalorder 1, %s13
    %p238 = scmp.lt.s32.totalorder %s13, 3
    %p239 = pnand %p237, %p238
    %p240 = pneg %p239
    // Predicated region
    $region45: #{mlp_forward.1} parent=5 // pred_check
      _
    $region46: #{mlp_forward.1} parent=5 // pred_check_branch
      %242 = sbr.rel (%p239) target = $region48
    $region47: #{mlp_forward.1} parent=5 // pred_region
      %s243 = ssub.s32 %s13, 1
      %s244 = smul.u32 16, %s18
      %p245 = scmp.lt.s32.totalorder %s244, 31
      %s246 = scalar_select %p245, %s244, 31
      %s247 = smul.addr %s246, 8
      %s248 = scalar_lea.vmem %s0, %s247
      %p249 = pneg %p39
      %p250 = pneg %p36
      %p251 = pneg %p60
      %p252 = pneg %p57
      %p253 = pneg %p81
      %p254 = pneg %p78
      %p255 = pneg %p102
      %p256 = pneg %p99
      %p257 = pneg %p123
      %p258 = pneg %p120
      %p259 = pneg %p144
      %p260 = pneg %p141
      %p261 = pneg %p165
      %p262 = pneg %p162
      %p263 = pneg %p191
      %p264 = pneg %p188
      %s265 = smul.u32 16, %s18
      %p266 = scmp.lt.s32.totalorder %s265, 31
      %s267 = scalar_select %p266, %s265, 31
      %s268 = smul.addr %s267, 8
      %s269 = scalar_lea.vmem %s7, %s268
      %s270 = smul.u32 16, %s18
      %p271 = scmp.lt.s32.totalorder %s270, 31
      %s272 = scalar_select %p271, %s270, 31
      %s273 = smul.addr %s272, 8
      %s274 = scalar_lea.vmem %s0, %s273
      %s275 = smul.u32 16, %s18
      %s276 = smul.u32 16, %s18
      %p277 = scmp.lt.s32.totalorder %s276, 31
      %s278 = scalar_select %p277, %s276, 31
      %s279 = smul.addr %s278, 8
      %s280 = scalar_lea.vmem %s7, %s279
      %s281 = smul.u32 16, %s18
      %v283 = vld [vmem:[%s274] sm:$0xff]
      %v284 = vld [vmem:[%s274 + $0x8] sm:$0xff]
      %v285 = vld [vmem:[%s274 + $0x10] sm:$0xff]
      %v286 = vld [vmem:[%s274 + $0x18] sm:$0xff]
      %v287 = vld [vmem:[%s274 + $0x20] sm:$0xff]
      %v288 = vld [vmem:[%s274 + $0x28] sm:$0xff]
      %v289 = vld [vmem:[%s274 + $0x30] sm:$0xff]
      %v290 = vld [vmem:[%s274 + $0x38] sm:$0xff]
      %v291 = vld [vmem:[%s274 + $0x40] sm:$0xff]
      %v292 = vld [vmem:[%s274 + $0x48] sm:$0xff]
      %v293 = vld [vmem:[%s274 + $0x50] sm:$0xff]
      %v294 = vld [vmem:[%s274 + $0x58] sm:$0xff]
      %v295 = vld [vmem:[%s274 + $0x60] sm:$0xff]
      %v296 = vld [vmem:[%s274 + $0x68] sm:$0xff]
      %v297 = vld [vmem:[%s274 + $0x70] sm:$0xff]
      %v298 = vld [vmem:[%s274 + $0x78] sm:$0xff]
      %v299 = vpack.c.bf16 %v284, %v283
      %v300 = vpack.c.bf16 %v286, %v285
      %v301 = vpack.c.bf16 %v288, %v287
      %v302 = vpack.c.bf16 %v290, %v289
      %v303 = vpack.c.bf16 %v292, %v291
      %v304 = vpack.c.bf16 %v294, %v293
      %v305 = vpack.c.bf16 %v296, %v295
      %v306 = vpack.c.bf16 %v298, %v297
      %v307 = vld [vmem:[%s1] sm:$0xff]
      %v308 = vld [vmem:[%s1 + $0x8] sm:$0xff]
      %v309 = vld [vmem:[%s1 + $0x10] sm:$0xff]
      %v310 = vld [vmem:[%s1 + $0x18] sm:$0xff]
      %v311 = vld [vmem:[%s1 + $0x20] sm:$0xff]
      %v312 = vld [vmem:[%s1 + $0x28] sm:$0xff]
      %v313 = vld [vmem:[%s1 + $0x30] sm:$0xff]
      %v314 = vld [vmem:[%s1 + $0x38] sm:$0xff]
      %v315 = vld [vmem:[%s1 + $0x40] sm:$0xff]
      %v316 = vld [vmem:[%s1 + $0x48] sm:$0xff]
      %v317 = vld [vmem:[%s1 + $0x50] sm:$0xff]
      %v318 = vld [vmem:[%s1 + $0x58] sm:$0xff]
      %v319 = vld [vmem:[%s1 + $0x60] sm:$0xff]
      %v320 = vld [vmem:[%s1 + $0x68] sm:$0xff]
      %v321 = vld [vmem:[%s1 + $0x70] sm:$0xff]
      %v322 = vld [vmem:[%s1 + $0x78] sm:$0xff]
      %v323 = vld [vmem:[%s2] sm:$0x3]
      %v325 = vlaneseq
      %v326 = vshrl.u32 %v325, 7
      %v327 = vsub.s32 0, %v326
      %v328 = vrot.slane %v323, %v327
      %v329 = vlaneseq
      %v330 = vshrl.u32 %v329, 7
      %v331 = vsub.s32 1, %v330
      %v332 = vrot.slane %v323, %v331
      %v351 = vunpack.c.l.b16 %v307
      %v352 = vunpack.c.h.b16 %v307
      %v353 = vunpack.c.l.b16 %v308
      %v354 = vunpack.c.h.b16 %v308
      %v355 = vunpack.c.l.b16 %v309
      %v356 = vunpack.c.h.b16 %v309
      %v357 = vunpack.c.l.b16 %v310
      %v358 = vunpack.c.h.b16 %v310
      %v359 = vunpack.c.l.b16 %v311
      %v360 = vunpack.c.h.b16 %v311
      %v361 = vunpack.c.l.b16 %v312
      %v362 = vunpack.c.h.b16 %v312
      %v363 = vunpack.c.l.b16 %v313
      %v364 = vunpack.c.h.b16 %v313
      %v365 = vunpack.c.l.b16 %v314
      %v366 = vunpack.c.h.b16 %v314
      %v367 = vunpack.c.l.b16 %v315
      %v368 = vunpack.c.h.b16 %v315
      %v369 = vunpack.c.l.b16 %v316
      %v370 = vunpack.c.h.b16 %v316
      %v371 = vunpack.c.l.b16 %v317
      %v372 = vunpack.c.h.b16 %v317
      %v373 = vunpack.c.l.b16 %v318
      %v374 = vunpack.c.h.b16 %v318
      %v375 = vunpack.c.l.b16 %v319
      %v376 = vunpack.c.h.b16 %v319
      %v377 = vunpack.c.l.b16 %v320
      %v378 = vunpack.c.h.b16 %v320
      %v379 = vunpack.c.l.b16 %v321
      %v380 = vunpack.c.h.b16 %v321
      %v381 = vunpack.c.l.b16 %v322
      %v382 = vunpack.c.h.b16 %v322
      %v383 = vpack.c.b16 %v353, %v351
      %v384 = vpack.c.b16 %v354, %v352
      %v385 = vpack.c.b16 %v357, %v355
      %v386 = vpack.c.b16 %v358, %v356
      %v387 = vpack.c.b16 %v361, %v359
      %v388 = vpack.c.b16 %v362, %v360
      %v389 = vpack.c.b16 %v365, %v363
      %v390 = vpack.c.b16 %v366, %v364
      %v391 = vpack.c.b16 %v369, %v367
      %v392 = vpack.c.b16 %v370, %v368
      %v393 = vpack.c.b16 %v373, %v371
      %v394 = vpack.c.b16 %v374, %v372
      %v395 = vpack.c.b16 %v377, %v375
      %v396 = vpack.c.b16 %v378, %v376
      %v397 = vpack.c.b16 %v381, %v379
      %v398 = vpack.c.b16 %v382, %v380
      %415 = vmatprep.subr.bf16.mxu0 %v398
      %416 = vmatpush1.bf16.msra.mxu0 %v397
      %417 = vmatprep.subr.bf16.mxu0 %v396
      %418 = vmatpush1.bf16.msra.mxu0 %v395
      %419 = vmatprep.subr.bf16.mxu0 %v394
      %420 = vmatpush1.bf16.msra.mxu0 %v393
      %421 = vmatprep.subr.bf16.mxu0 %v392
      %422 = vmatpush1.bf16.msra.mxu0 %v391
      %423 = vmatprep.subr.bf16.mxu0 %v390
      %424 = vmatpush1.bf16.msra.mxu0 %v389
      %425 = vmatprep.subr.bf16.mxu0 %v388
      %426 = vmatpush1.bf16.msra.mxu0 %v387
      %427 = vmatprep.subr.bf16.mxu0 %v386
      %428 = vmatpush1.bf16.msra.mxu0 %v385
      %429 = vmatprep.subr.bf16.mxu0 %v384
      %430 = vmatpush1.bf16.msra.mxu0 %v383
      %431 = vmatprep.subr.bf16.mxu0 0
      %432 = vmatpush2.bf16.msra.mxu0 0
      %433 = vmatprep.subr.bf16.mxu0 0
      %434 = vmatpush2.bf16.msra.mxu0 0
      %435 = vmatprep.subr.bf16.mxu0 0
      %436 = vmatpush2.bf16.msra.mxu0 0
      %437 = vmatprep.subr.bf16.mxu0 0
      %438 = vmatpush2.bf16.msra.mxu0 0
      %439 = vmatprep.subr.bf16.mxu0 0
      %440 = vmatpush2.bf16.msra.mxu0 0
      %441 = vmatprep.subr.bf16.mxu0 0
      %442 = vmatpush2.bf16.msra.mxu0 0
      %443 = vmatprep.subr.bf16.mxu0 0
      %444 = vmatpush2.bf16.msra.mxu0 0
      %445 = vmatprep.subr.bf16.mxu0 0
      %446 = vmatpush2.bf16.msra.mxu0 0
      %447 = vmatprep.mubr.bf16.mxu0 0
      %448 = vmatmul.mubr.bf16.gmra.mxu0 %v299
      %v449 = vpop.f32.mrf.mxu0
      %v450 = vadd.f32 %v328, %v449
      %v451 = vpop.f32.mrf.mxu0
      %v452 = vadd.f32 %v332, %v451
      %v453 = vpop.f32.mrf.mxu0
      %v454 = vadd.f32 %v328, %v453
      %v455 = vpop.f32.mrf.mxu0
      %v456 = vadd.f32 %v332, %v455
      %457 = vmatprep.mubr.bf16.mxu0 0
      %458 = vmatmul.mubr.bf16.gmra.mxu0 %v300
      %v459 = vpop.f32.mrf.mxu0
      %v460 = vadd.f32 %v328, %v459
      %v461 = vpop.f32.mrf.mxu0
      %v462 = vadd.f32 %v332, %v461
      %v463 = vpop.f32.mrf.mxu0
      %v464 = vadd.f32 %v328, %v463
      %v465 = vpop.f32.mrf.mxu0
      %v466 = vadd.f32 %v332, %v465
      %467 = vmatprep.mubr.bf16.mxu0 0
      %468 = vmatmul.mubr.bf16.gmra.mxu0 %v301
      %v469 = vpop.f32.mrf.mxu0
      %v470 = vadd.f32 %v328, %v469
      %v471 = vpop.f32.mrf.mxu0
      %v472 = vadd.f32 %v332, %v471
      %v473 = vpop.f32.mrf.mxu0
      %v474 = vadd.f32 %v328, %v473
      %v475 = vpop.f32.mrf.mxu0
      %v476 = vadd.f32 %v332, %v475
      %477 = vmatprep.mubr.bf16.mxu0 0
      %478 = vmatmul.mubr.bf16.gmra.mxu0 %v302
      %v479 = vpop.f32.mrf.mxu0
      %v480 = vadd.f32 %v328, %v479
      %v481 = vpop.f32.mrf.mxu0
      %v482 = vadd.f32 %v332, %v481
      %v483 = vpop.f32.mrf.mxu0
      %v484 = vadd.f32 %v328, %v483
      %v485 = vpop.f32.mrf.mxu0
      %v486 = vadd.f32 %v332, %v485
      %487 = vmatprep.mubr.bf16.mxu0 0
      %488 = vmatmul.mubr.bf16.gmra.mxu0 %v303
      %v489 = vpop.f32.mrf.mxu0
      %v490 = vadd.f32 %v328, %v489
      %v491 = vpop.f32.mrf.mxu0
      %v492 = vadd.f32 %v332, %v491
      %v493 = vpop.f32.mrf.mxu0
      %v494 = vadd.f32 %v328, %v493
      %v495 = vpop.f32.mrf.mxu0
      %v496 = vadd.f32 %v332, %v495
      %497 = vmatprep.mubr.bf16.mxu0 0
      %498 = vmatmul.mubr.bf16.gmra.mxu0 %v304
      %v499 = vpop.f32.mrf.mxu0
      %v500 = vadd.f32 %v328, %v499
      %v501 = vpop.f32.mrf.mxu0
      %v502 = vadd.f32 %v332, %v501
      %v503 = vpop.f32.mrf.mxu0
      %v504 = vadd.f32 %v328, %v503
      %v505 = vpop.f32.mrf.mxu0
      %v506 = vadd.f32 %v332, %v505
      %507 = vmatprep.mubr.bf16.mxu0 0
      %508 = vmatmul.mubr.bf16.gmra.mxu0 %v305
      %v509 = vpop.f32.mrf.mxu0
      %v510 = vadd.f32 %v328, %v509
      %v511 = vpop.f32.mrf.mxu0
      %v512 = vadd.f32 %v332, %v511
      %v513 = vpop.f32.mrf.mxu0
      %v514 = vadd.f32 %v328, %v513
      %v515 = vpop.f32.mrf.mxu0
      %v516 = vadd.f32 %v332, %v515
      %517 = vmatprep.mubr.bf16.mxu0 0
      %518 = vmatmul.mubr.bf16.gmra.mxu0 %v306
      %v519 = vpop.f32.mrf.mxu0
      %v520 = vadd.f32 %v328, %v519
      %v521 = vpop.f32.mrf.mxu0
      %v522 = vadd.f32 %v332, %v521
      %v523 = vpop.f32.mrf.mxu0
      %v524 = vadd.f32 %v328, %v523
      %v525 = vpop.f32.mrf.mxu0
      %v526 = vadd.f32 %v332, %v525
      %527 = vdwg.mxu0
      %v528 = vmax.f32 %v450, 0.0
      %v529 = vmax.f32 %v452, 0.0
      %v530 = vmax.f32 %v454, 0.0
      %v531 = vmax.f32 %v456, 0.0
      %v532 = vmax.f32 %v460, 0.0
      %v533 = vmax.f32 %v462, 0.0
      %v534 = vmax.f32 %v464, 0.0
      %v535 = vmax.f32 %v466, 0.0
      %v536 = vmax.f32 %v470, 0.0
      %v537 = vmax.f32 %v472, 0.0
      %v538 = vmax.f32 %v474, 0.0
      %v539 = vmax.f32 %v476, 0.0
      %v540 = vmax.f32 %v480, 0.0
      %v541 = vmax.f32 %v482, 0.0
      %v542 = vmax.f32 %v484, 0.0
      %v543 = vmax.f32 %v486, 0.0
      %v544 = vmax.f32 %v490, 0.0
      %v545 = vmax.f32 %v492, 0.0
      %v546 = vmax.f32 %v494, 0.0
      %v547 = vmax.f32 %v496, 0.0
      %v548 = vmax.f32 %v500, 0.0
      %v549 = vmax.f32 %v502, 0.0
      %v550 = vmax.f32 %v504, 0.0
      %v551 = vmax.f32 %v506, 0.0
      %v552 = vmax.f32 %v510, 0.0
      %v553 = vmax.f32 %v512, 0.0
      %v554 = vmax.f32 %v514, 0.0
      %v555 = vmax.f32 %v516, 0.0
      %v556 = vmax.f32 %v520, 0.0
      %v557 = vmax.f32 %v522, 0.0
      %v558 = vmax.f32 %v524, 0.0
      %v559 = vmax.f32 %v526, 0.0
      %v560 = vpack.c.bf16 %v530, %v528
      %v561 = vpack.c.bf16 %v531, %v529
      %v562 = vpack.c.bf16 %v534, %v532
      %v563 = vpack.c.bf16 %v535, %v533
      %v564 = vpack.c.bf16 %v538, %v536
      %v565 = vpack.c.bf16 %v539, %v537
      %v566 = vpack.c.bf16 %v542, %v540
      %v567 = vpack.c.bf16 %v543, %v541
      %v568 = vpack.c.bf16 %v546, %v544
      %v569 = vpack.c.bf16 %v547, %v545
      %v570 = vpack.c.bf16 %v550, %v548
      %v571 = vpack.c.bf16 %v551, %v549
      %v572 = vpack.c.bf16 %v554, %v552
      %v573 = vpack.c.bf16 %v555, %v553
      %v574 = vpack.c.bf16 %v558, %v556
      %v575 = vpack.c.bf16 %v559, %v557
      %v576 = vld [vmem:[%s3] sm:$0xf]
      %v577 = vld [vmem:[%s3 + $0x4] sm:$0xf]
      %v578 = vld [vmem:[%s3 + $0x8] sm:$0xf]
      %v579 = vld [vmem:[%s3 + $0xc] sm:$0xf]
      %v580 = vld [vmem:[%s3 + $0x10] sm:$0xf]
      %v581 = vld [vmem:[%s3 + $0x14] sm:$0xf]
      %v582 = vld [vmem:[%s3 + $0x18] sm:$0xf]
      %v583 = vld [vmem:[%s3 + $0x1c] sm:$0xf]
      %v584 = vld [vmem:[%s3 + $0x20] sm:$0xf]
      %v585 = vld [vmem:[%s3 + $0x24] sm:$0xf]
      %v586 = vld [vmem:[%s3 + $0x28] sm:$0xf]
      %v587 = vld [vmem:[%s3 + $0x2c] sm:$0xf]
      %v588 = vld [vmem:[%s3 + $0x30] sm:$0xf]
      %v589 = vld [vmem:[%s3 + $0x34] sm:$0xf]
      %v590 = vld [vmem:[%s3 + $0x38] sm:$0xf]
      %v591 = vld [vmem:[%s3 + $0x3c] sm:$0xf]
      %v592 = vld [vmem:[%s3 + $0x40] sm:$0xf]
      %v593 = vld [vmem:[%s3 + $0x44] sm:$0xf]
      %v594 = vld [vmem:[%s3 + $0x48] sm:$0xf]
      %v595 = vld [vmem:[%s3 + $0x4c] sm:$0xf]
      %v596 = vld [vmem:[%s3 + $0x50] sm:$0xf]
      %v597 = vld [vmem:[%s3 + $0x54] sm:$0xf]
      %v598 = vld [vmem:[%s3 + $0x58] sm:$0xf]
      %v599 = vld [vmem:[%s3 + $0x5c] sm:$0xf]
      %v600 = vld [vmem:[%s3 + $0x60] sm:$0xf]
      %v601 = vld [vmem:[%s3 + $0x64] sm:$0xf]
      %v602 = vld [vmem:[%s3 + $0x68] sm:$0xf]
      %v603 = vld [vmem:[%s3 + $0x6c] sm:$0xf]
      %v604 = vld [vmem:[%s3 + $0x70] sm:$0xf]
      %v605 = vld [vmem:[%s3 + $0x74] sm:$0xf]
      %v606 = vld [vmem:[%s3 + $0x78] sm:$0xf]
      %v607 = vld [vmem:[%s3 + $0x7c] sm:$0xf]
      %v608 = vld [vmem:[%s4] sm:$0x1]
      %v610 = vlaneseq
      %v611 = vshrl.u32 %v610, 7
      %v612 = vsub.s32 0, %v611
      %v613 = vrot.slane %v608, %v612
      %v647 = vunpack.c.l.b16 %v576
      %v648 = vunpack.c.l.b16 %v577
      %v649 = vunpack.c.l.b16 %v578
      %v650 = vunpack.c.l.b16 %v579
      %v651 = vunpack.c.l.b16 %v580
      %v652 = vunpack.c.l.b16 %v581
      %v653 = vunpack.c.l.b16 %v582
      %v654 = vunpack.c.l.b16 %v583
      %v655 = vunpack.c.l.b16 %v584
      %v656 = vunpack.c.l.b16 %v585
      %v657 = vunpack.c.l.b16 %v586
      %v658 = vunpack.c.l.b16 %v587
      %v659 = vunpack.c.l.b16 %v588
      %v660 = vunpack.c.l.b16 %v589
      %v661 = vunpack.c.l.b16 %v590
      %v662 = vunpack.c.l.b16 %v591
      %v663 = vunpack.c.l.b16 %v592
      %v664 = vunpack.c.l.b16 %v593
      %v665 = vunpack.c.l.b16 %v594
      %v666 = vunpack.c.l.b16 %v595
      %v667 = vunpack.c.l.b16 %v596
      %v668 = vunpack.c.l.b16 %v597
      %v669 = vunpack.c.l.b16 %v598
      %v670 = vunpack.c.l.b16 %v599
      %v671 = vunpack.c.l.b16 %v600
      %v672 = vunpack.c.l.b16 %v601
      %v673 = vunpack.c.l.b16 %v602
      %v674 = vunpack.c.l.b16 %v603
      %v675 = vunpack.c.l.b16 %v604
      %v676 = vunpack.c.l.b16 %v605
      %v677 = vunpack.c.l.b16 %v606
      %v678 = vunpack.c.l.b16 %v607
      %v679 = vpack.c.b16 %v648, %v647
      %v680 = vpack.c.b16 %v650, %v649
      %v681 = vpack.c.b16 %v652, %v651
      %v682 = vpack.c.b16 %v654, %v653
      %v683 = vpack.c.b16 %v656, %v655
      %v684 = vpack.c.b16 %v658, %v657
      %v685 = vpack.c.b16 %v660, %v659
      %v686 = vpack.c.b16 %v662, %v661
      %v687 = vpack.c.b16 %v664, %v663
      %v688 = vpack.c.b16 %v666, %v665
      %v689 = vpack.c.b16 %v668, %v667
      %v690 = vpack.c.b16 %v670, %v669
      %v691 = vpack.c.b16 %v672, %v671
      %v692 = vpack.c.b16 %v674, %v673
      %v693 = vpack.c.b16 %v676, %v675
      %v694 = vpack.c.b16 %v678, %v677
      %711 = vmatprep.subr.bf16.mxu0 0
      %712 = vmatpush1.bf16.msra.mxu0 %v686
      %713 = vmatprep.subr.bf16.mxu0 0
      %714 = vmatpush1.bf16.msra.mxu0 %v685
      %715 = vmatprep.subr.bf16.mxu0 0
      %716 = vmatpush1.bf16.msra.mxu0 %v684
      %717 = vmatprep.subr.bf16.mxu0 0
      %718 = vmatpush1.bf16.msra.mxu0 %v683
      %719 = vmatprep.subr.bf16.mxu0 0
      %720 = vmatpush1.bf16.msra.mxu0 %v682
      %721 = vmatprep.subr.bf16.mxu0 0
      %722 = vmatpush1.bf16.msra.mxu0 %v681
      %723 = vmatprep.subr.bf16.mxu0 0
      %724 = vmatpush1.bf16.msra.mxu0 %v680
      %725 = vmatprep.subr.bf16.mxu0 0
      %726 = vmatpush1.bf16.msra.mxu0 %v679
      %727 = vmatprep.subr.bf16.mxu0 0
      %728 = vmatpush2.bf16.msra.mxu0 %v694
      %729 = vmatprep.subr.bf16.mxu0 0
      %730 = vmatpush2.bf16.msra.mxu0 %v693
      %731 = vmatprep.subr.bf16.mxu0 0
      %732 = vmatpush2.bf16.msra.mxu0 %v692
      %733 = vmatprep.subr.bf16.mxu0 0
      %734 = vmatpush2.bf16.msra.mxu0 %v691
      %735 = vmatprep.subr.bf16.mxu0 0
      %736 = vmatpush2.bf16.msra.mxu0 %v690
      %737 = vmatprep.subr.bf16.mxu0 0
      %738 = vmatpush2.bf16.msra.mxu0 %v689
      %739 = vmatprep.subr.bf16.mxu0 0
      %740 = vmatpush2.bf16.msra.mxu0 %v688
      %741 = vmatprep.subr.bf16.mxu0 0
      %742 = vmatpush2.bf16.msra.mxu0 %v687
      %743 = vmatprep.mubr.bf16.mxu0 %v561
      %744 = vmatmul.mubr.bf16.gmra.mxu0 %v560
      %v745 = vpop.f32.mrf.mxu0
      %v746 = vadd.f32 %v613, %v745
      %v747 = vpop.f32.mrf.mxu0
      %v748 = vpop.f32.mrf.mxu0
      %v749 = vadd.f32 %v613, %v748
      %v750 = vpop.f32.mrf.mxu0
      %751 = vmatprep.mubr.bf16.mxu0 %v563
      %752 = vmatmul.mubr.bf16.gmra.mxu0 %v562
      %v753 = vpop.f32.mrf.mxu0
      %v754 = vadd.f32 %v613, %v753
      %v755 = vpop.f32.mrf.mxu0
      %v756 = vpop.f32.mrf.mxu0
      %v757 = vadd.f32 %v613, %v756
      %v758 = vpop.f32.mrf.mxu0
      %759 = vmatprep.mubr.bf16.mxu0 %v565
      %760 = vmatmul.mubr.bf16.gmra.mxu0 %v564
      %v761 = vpop.f32.mrf.mxu0
      %v762 = vadd.f32 %v613, %v761
      %v763 = vpop.f32.mrf.mxu0
      %v764 = vpop.f32.mrf.mxu0
      %v765 = vadd.f32 %v613, %v764
      %v766 = vpop.f32.mrf.mxu0
      %767 = vmatprep.mubr.bf16.mxu0 %v567
      %768 = vmatmul.mubr.bf16.gmra.mxu0 %v566
      %v769 = vpop.f32.mrf.mxu0
      %v770 = vadd.f32 %v613, %v769
      %v771 = vpop.f32.mrf.mxu0
      %v772 = vpop.f32.mrf.mxu0
      %v773 = vadd.f32 %v613, %v772
      %v774 = vpop.f32.mrf.mxu0
      %775 = vmatprep.mubr.bf16.mxu0 %v569
      %776 = vmatmul.mubr.bf16.gmra.mxu0 %v568
      %v777 = vpop.f32.mrf.mxu0
      %v778 = vadd.f32 %v613, %v777
      %v779 = vpop.f32.mrf.mxu0
      %v780 = vpop.f32.mrf.mxu0
      %v781 = vadd.f32 %v613, %v780
      %v782 = vpop.f32.mrf.mxu0
      %783 = vmatprep.mubr.bf16.mxu0 %v571
      %784 = vmatmul.mubr.bf16.gmra.mxu0 %v570
      %v785 = vpop.f32.mrf.mxu0
      %v786 = vadd.f32 %v613, %v785
      %v787 = vpop.f32.mrf.mxu0
      %v788 = vpop.f32.mrf.mxu0
      %v789 = vadd.f32 %v613, %v788
      %v790 = vpop.f32.mrf.mxu0
      %791 = vmatprep.mubr.bf16.mxu0 %v573
      %792 = vmatmul.mubr.bf16.gmra.mxu0 %v572
      %v793 = vpop.f32.mrf.mxu0
      %v794 = vadd.f32 %v613, %v793
      %v795 = vpop.f32.mrf.mxu0
      %v796 = vpop.f32.mrf.mxu0
      %v797 = vadd.f32 %v613, %v796
      %v798 = vpop.f32.mrf.mxu0
      %799 = vmatprep.mubr.bf16.mxu0 %v575
      %800 = vmatmul.mubr.bf16.gmra.mxu0 %v574
      %v801 = vpop.f32.mrf.mxu0
      %v802 = vadd.f32 %v613, %v801
      %v803 = vpop.f32.mrf.mxu0
      %v804 = vpop.f32.mrf.mxu0
      %v805 = vadd.f32 %v613, %v804
      %v806 = vpop.f32.mrf.mxu0
      %807 = vdwg.mxu0
      %v808 = vmax.f32 %v746, 0.0
      %v809 = vmax.f32 %v749, 0.0
      %v810 = vmax.f32 %v754, 0.0
      %v811 = vmax.f32 %v757, 0.0
      %v812 = vmax.f32 %v762, 0.0
      %v813 = vmax.f32 %v765, 0.0
      %v814 = vmax.f32 %v770, 0.0
      %v815 = vmax.f32 %v773, 0.0
      %v816 = vmax.f32 %v778, 0.0
      %v817 = vmax.f32 %v781, 0.0
      %v818 = vmax.f32 %v786, 0.0
      %v819 = vmax.f32 %v789, 0.0
      %v820 = vmax.f32 %v794, 0.0
      %v821 = vmax.f32 %v797, 0.0
      %v822 = vmax.f32 %v802, 0.0
      %v823 = vmax.f32 %v805, 0.0
      %v824 = vpack.c.bf16 %v809, %v808
      %v825 = vpack.c.bf16 %v811, %v810
      %v826 = vpack.c.bf16 %v813, %v812
      %v827 = vpack.c.bf16 %v815, %v814
      %v828 = vpack.c.bf16 %v817, %v816
      %v829 = vpack.c.bf16 %v819, %v818
      %v830 = vpack.c.bf16 %v821, %v820
      %v831 = vpack.c.bf16 %v823, %v822
      %v832 = vld [vmem:[%s5] sm:$0xf]
      %v833 = vld [vmem:[%s5 + $0x4] sm:$0xf]
      %v834 = vld [vmem:[%s5 + $0x8] sm:$0xf]
      %v835 = vld [vmem:[%s5 + $0xc] sm:$0xf]
      %v836 = vld [vmem:[%s5 + $0x10] sm:$0xf]
      %v837 = vld [vmem:[%s5 + $0x14] sm:$0xf]
      %v838 = vld [vmem:[%s5 + $0x18] sm:$0xf]
      %v839 = vld [vmem:[%s5 + $0x1c] sm:$0xf]
      %v840 = vld [vmem:[%s5 + $0x20] sm:$0xf]
      %v841 = vld [vmem:[%s5 + $0x24] sm:$0xf]
      %v842 = vld [vmem:[%s5 + $0x28] sm:$0xf]
      %v843 = vld [vmem:[%s5 + $0x2c] sm:$0xf]
      %v844 = vld [vmem:[%s5 + $0x30] sm:$0xf]
      %v845 = vld [vmem:[%s5 + $0x34] sm:$0xf]
      %v846 = vld [vmem:[%s5 + $0x38] sm:$0xf]
      %v847 = vld [vmem:[%s5 + $0x3c] sm:$0xf]
      %v848 = vld [vmem:[%s6] sm:$0x1]
      %v850 = vlaneseq
      %v851 = vshrl.u32 %v850, 7
      %v852 = vsub.s32 0, %v851
      %v853 = vrot.slane %v848, %v852
      %v871 = vunpack.c.l.b16 %v832
      %v872 = vunpack.c.l.b16 %v833
      %v873 = vunpack.c.l.b16 %v834
      %v874 = vunpack.c.l.b16 %v835
      %v875 = vunpack.c.l.b16 %v836
      %v876 = vunpack.c.l.b16 %v837
      %v877 = vunpack.c.l.b16 %v838
      %v878 = vunpack.c.l.b16 %v839
      %v879 = vunpack.c.l.b16 %v840
      %v880 = vunpack.c.l.b16 %v841
      %v881 = vunpack.c.l.b16 %v842
      %v882 = vunpack.c.l.b16 %v843
      %v883 = vunpack.c.l.b16 %v844
      %v884 = vunpack.c.l.b16 %v845
      %v885 = vunpack.c.l.b16 %v846
      %v886 = vunpack.c.l.b16 %v847
      %v887 = vpack.c.b16 %v872, %v871
      %v888 = vpack.c.b16 %v874, %v873
      %v889 = vpack.c.b16 %v876, %v875
      %v890 = vpack.c.b16 %v878, %v877
      %v891 = vpack.c.b16 %v880, %v879
      %v892 = vpack.c.b16 %v882, %v881
      %v893 = vpack.c.b16 %v884, %v883
      %v894 = vpack.c.b16 %v886, %v885
      %903 = vmatprep.subr.bf16.mxu0 0
      %904 = vmatpush1.bf16.msra.mxu0 %v894
      %905 = vmatprep.subr.bf16.mxu0 0
      %906 = vmatpush1.bf16.msra.mxu0 %v893
      %907 = vmatprep.subr.bf16.mxu0 0
      %908 = vmatpush1.bf16.msra.mxu0 %v892
      %909 = vmatprep.subr.bf16.mxu0 0
      %910 = vmatpush1.bf16.msra.mxu0 %v891
      %911 = vmatprep.subr.bf16.mxu0 0
      %912 = vmatpush1.bf16.msra.mxu0 %v890
      %913 = vmatprep.subr.bf16.mxu0 0
      %914 = vmatpush1.bf16.msra.mxu0 %v889
      %915 = vmatprep.subr.bf16.mxu0 0
      %916 = vmatpush1.bf16.msra.mxu0 %v888
      %917 = vmatprep.subr.bf16.mxu0 0
      %918 = vmatpush1.bf16.msra.mxu0 %v887
      %919 = vmatprep.subr.bf16.mxu0 0
      %920 = vmatpush2.bf16.msra.mxu0 0
      %921 = vmatprep.subr.bf16.mxu0 0
      %922 = vmatpush2.bf16.msra.mxu0 0
      %923 = vmatprep.subr.bf16.mxu0 0
      %924 = vmatpush2.bf16.msra.mxu0 0
      %925 = vmatprep.subr.bf16.mxu0 0
      %926 = vmatpush2.bf16.msra.mxu0 0
      %927 = vmatprep.subr.bf16.mxu0 0
      %928 = vmatpush2.bf16.msra.mxu0 0
      %929 = vmatprep.subr.bf16.mxu0 0
      %930 = vmatpush2.bf16.msra.mxu0 0
      %931 = vmatprep.subr.bf16.mxu0 0
      %932 = vmatpush2.bf16.msra.mxu0 0
      %933 = vmatprep.subr.bf16.mxu0 0
      %934 = vmatpush2.bf16.msra.mxu0 0
      %935 = vmatprep.mubr.bf16.mxu0 0
      %936 = vmatmul.mubr.bf16.gmra.mxu0 %v824
      %v937 = vpop.f32.mrf.mxu0
      %v938 = vadd.f32 %v853, %v937
      %v939 = vpop.f32.mrf.mxu0
      %v940 = vpop.f32.mrf.mxu0
      %v941 = vadd.f32 %v853, %v940
      %v942 = vpop.f32.mrf.mxu0
      %943 = vmatprep.mubr.bf16.mxu0 0
      %944 = vmatmul.mubr.bf16.gmra.mxu0 %v825
      %v945 = vpop.f32.mrf.mxu0
      %v946 = vadd.f32 %v853, %v945
      %v947 = vpop.f32.mrf.mxu0
      %v948 = vpop.f32.mrf.mxu0
      %v949 = vadd.f32 %v853, %v948
      %v950 = vpop.f32.mrf.mxu0
      %951 = vmatprep.mubr.bf16.mxu0 0
      %952 = vmatmul.mubr.bf16.gmra.mxu0 %v826
      %v953 = vpop.f32.mrf.mxu0
      %v954 = vadd.f32 %v853, %v953
      %v955 = vpop.f32.mrf.mxu0
      %v956 = vpop.f32.mrf.mxu0
      %v957 = vadd.f32 %v853, %v956
      %v958 = vpop.f32.mrf.mxu0
      %959 = vmatprep.mubr.bf16.mxu0 0
      %960 = vmatmul.mubr.bf16.gmra.mxu0 %v827
      %v961 = vpop.f32.mrf.mxu0
      %v962 = vadd.f32 %v853, %v961
      %v963 = vpop.f32.mrf.mxu0
      %v964 = vpop.f32.mrf.mxu0
      %v965 = vadd.f32 %v853, %v964
      %v966 = vpop.f32.mrf.mxu0
      %967 = vmatprep.mubr.bf16.mxu0 0
      %968 = vmatmul.mubr.bf16.gmra.mxu0 %v828
      %v969 = vpop.f32.mrf.mxu0
      %v970 = vadd.f32 %v853, %v969
      %v971 = vpop.f32.mrf.mxu0
      %v972 = vpop.f32.mrf.mxu0
      %v973 = vadd.f32 %v853, %v972
      %v974 = vpop.f32.mrf.mxu0
      %975 = vmatprep.mubr.bf16.mxu0 0
      %976 = vmatmul.mubr.bf16.gmra.mxu0 %v829
      %v977 = vpop.f32.mrf.mxu0
      %v978 = vadd.f32 %v853, %v977
      %v979 = vpop.f32.mrf.mxu0
      %v980 = vpop.f32.mrf.mxu0
      %v981 = vadd.f32 %v853, %v980
      %v982 = vpop.f32.mrf.mxu0
      %983 = vmatprep.mubr.bf16.mxu0 0
      %984 = vmatmul.mubr.bf16.gmra.mxu0 %v830
      %v985 = vpop.f32.mrf.mxu0
      %v986 = vadd.f32 %v853, %v985
      %v987 = vpop.f32.mrf.mxu0
      %v988 = vpop.f32.mrf.mxu0
      %v989 = vadd.f32 %v853, %v988
      %v990 = vpop.f32.mrf.mxu0
      %991 = vmatprep.mubr.bf16.mxu0 0
      %992 = vmatmul.mubr.bf16.gmra.mxu0 %v831
      %v993 = vpop.f32.mrf.mxu0
      %v994 = vadd.f32 %v853, %v993
      %v995 = vpop.f32.mrf.mxu0
      %v996 = vpop.f32.mrf.mxu0
      %v997 = vadd.f32 %v853, %v996
      %v998 = vpop.f32.mrf.mxu0
      %999 = vdwg.mxu0
      %1000 = vst [vmem:[%s280] sm:$0xff] %v938
      %1001 = vst [vmem:[%s280 + $0x8] sm:$0xff] %v941
      %1002 = vst [vmem:[%s280 + $0x10] sm:$0xff] %v946
      %1003 = vst [vmem:[%s280 + $0x18] sm:$0xff] %v949
      %1004 = vst [vmem:[%s280 + $0x20] sm:$0xff] %v954
      %1005 = vst [vmem:[%s280 + $0x28] sm:$0xff] %v957
      %1006 = vst [vmem:[%s280 + $0x30] sm:$0xff] %v962
      %1007 = vst [vmem:[%s280 + $0x38] sm:$0xff] %v965
      %1008 = vst [vmem:[%s280 + $0x40] sm:$0xff] %v970
      %1009 = vst [vmem:[%s280 + $0x48] sm:$0xff] %v973
      %1010 = vst [vmem:[%s280 + $0x50] sm:$0xff] %v978
      %1011 = vst [vmem:[%s280 + $0x58] sm:$0xff] %v981
      %1012 = vst [vmem:[%s280 + $0x60] sm:$0xff] %v986
      %1013 = vst [vmem:[%s280 + $0x68] sm:$0xff] %v989
      %1014 = vst [vmem:[%s280 + $0x70] sm:$0xff] %v994
      %1015 = vst [vmem:[%s280 + $0x78] sm:$0xff] %v997
      %s1016 = smul.u32 16, %s18
      %p1017 = scmp.lt.s32.totalorder %s1016, 31
      %s1018 = scalar_select %p1017, %s1016, 31
      %s1019 = smul.addr %s1018, 8
      %s1020 = scalar_lea.vmem %s7, %s1019
      // Predicated region
      $region49: #{mlp_forward.1} parent=47 // pred_check
        %p1021 = pneg %p188
      $region50: #{mlp_forward.1} parent=47 // pred_check_branch
        %1023 = sbr.rel (%p1021) target = $region52
      $region51: #{mlp_forward.1} parent=47 // pred_region
        %s1024 = smul.u32 16, %s18
      $region52: #{mlp_forward.1} parent=47 // pred_fallthru
        _
    $region48: #{mlp_forward.1} parent=5 // pred_fallthru
      _
    %p1025 = scmp.le.s32.totalorder 2, %s13
    // Predicated region
    $region53: #{mlp_forward.1} parent=5 // pred_check
      %p1026 = pneg %p1025
    $region54: #{mlp_forward.1} parent=5 // pred_check_branch
      %1028 = sbr.rel (%p1026) target = $region56
    $region55: #{mlp_forward.1} parent=5 // pred_region
      %s1029 = ssub.s32 %s13, 2
      // Predicated region
      $region57: #{mlp_forward.1} parent=55 // pred_check
        %p1030 = pneg %p194
      $region58: #{mlp_forward.1} parent=55 // pred_check_branch
        %1032 = sbr.rel (%p1030) target = $region60
      $region59: #{mlp_forward.1} parent=55 // pred_region
        %s1033 = smul.u32 16, %s19
        %p1034 = scmp.lt.s32.totalorder %s1033, 31
        %s1035 = scalar_select %p1034, %s1033, 31
        %s1036 = smul.addr %s1035, 8
        %s1037 = scalar_lea.vmem %s7, %s1036
      $region60: #{mlp_forward.1} parent=55 // pred_fallthru
        _
    $region56: #{mlp_forward.1} parent=5 // pred_fallthru
      _
  $region6: #{mlp_forward.1} parent=0 // loop_footer
    %s17 = sadd.s32 1, %s13
  $region7: #{mlp_forward.1} parent=0 // loop_footer_branch
    %12 = sbr.rel target = $region3
  $region8: #{mlp_forward.1} parent=0 // loop_exit
    _

</llo_original>
